<compile_context>
chip_gen: v5e
topology: v5e:2x2
jax: 0.10.0
libtpu: 0.0.40
codegen_flags: <defaults>
</compile_context>

<pallas_src>
import functools

import jax
import jax.numpy as jnp
from jax.experimental import pallas as pl
from jax.experimental.pallas import tpu as pltpu


# ---------------------------------------------------------------------------
# Small-K path: out = x @ W^T + b as K VPU broadcast multiply-adds.
# The wrapper-side transpose is kept here on purpose: with K <= 8 the weight
# is tiny (<= 8*N elements), so the transpose cost is negligible and the
# in-kernel indexing stays lane-friendly.
# ---------------------------------------------------------------------------
def _linear_small_k_kernel(x_ref, wt_ref, b_ref, o_ref):
    x = x_ref[...]                                   # (bm, K)
    wt = wt_ref[...]                                 # (K, N)
    acc = jnp.zeros(o_ref.shape, jnp.float32) + b_ref[...]   # bias folded into init
    for k in range(x.shape[1]):                      # static unroll, K <= 8
        acc = acc + x[:, k:k + 1] * wt[k:k + 1, :]
    o_ref[...] = acc.astype(o_ref.dtype)


def _linear_small_k(x, weight, bias):
    B, K = x.shape
    N = weight.shape[0]
    wt = weight.T                                    # (K, N); tiny for K <= 8
    b2 = bias.reshape(1, N)
    # Grid over B so a huge batch never produces an unbounded VMEM block.
    bm = B if B <= 512 else 512                      # 512 % 8 == 0 -> always legal
    grid = (pl.cdiv(B, bm),)
    return pl.pallas_call(
        _linear_small_k_kernel,
        out_shape=jax.ShapeDtypeStruct((B, N), jnp.float32),
        grid=grid,
        in_specs=[
            pl.BlockSpec((bm, K), lambda i: (i, 0)),
            pl.BlockSpec((K, N), lambda i: (0, 0)),
            pl.BlockSpec((1, N), lambda i: (0, 0)),
        ],
        out_specs=pl.BlockSpec((bm, N), lambda i: (i, 0)),
        compiler_params=pltpu.CompilerParams(
            dimension_semantics=("parallel",),
        ),
        cost_estimate=pl.CostEstimate(
            flops=2 * B * K * N,
            transcendentals=0,
            bytes_accessed=4 * (B * K + K * N + N + B * N),
        ),
    )(x, wt, b2)


# ---------------------------------------------------------------------------
# Gridded MXU path (template for real linear layers).
# ---------------------------------------------------------------------------
def _matmul_bias_kernel(x_ref, w_ref, b_ref, o_ref):
    # x_ref: (tm, tk); w_ref: (tn, tk) — weight kept in PyTorch (N, K) layout,
    # contraction on dim 1 of both operands (no wrapper-side W.T in HBM).
    k = pl.program_id(2)

    @pl.when(k == 0)
    def _():
        # Bias folded into the accumulator init (no extra finalize add pass).
        o_ref[...] = jnp.broadcast_to(b_ref[...], o_ref.shape).astype(o_ref.dtype)

    # f32 output block doubles as the accumulator; it stays VMEM-resident
    # across the K axis because the out index_map ignores k.
    o_ref[...] += jax.lax.dot_general(
        x_ref[...],
        w_ref[...],
        dimension_numbers=(((1,), (1,)), ((), ())),
        preferred_element_type=jnp.float32,
    )


def _choose_tile(dim, prefs, want_multiple_blocks=False):
    candidates = [t for t in prefs if dim >= t and dim % t == 0]
    if want_multiple_blocks:
        for t in candidates:
            if dim // t >= 2:       # feed both v7x TensorCores on parallel axes
                return t
    if candidates:
        return candidates[0]
    # Full-extent fallback keeps blocks exactly covering the array so the K
    # reduction never accumulates padded garbage from ragged blocks.
    # TODO(synk): for huge non-divisible dims, shrink tm/tn to compensate.
    return dim


def _vmem_limit_bytes():
    # Generation-aware: ~75% of physical VMEM (v7x: 64 MiB -> 48 MiB,
    # v5e/v6e: 128 MiB -> 96 MiB), with a conservative fallback.
    try:
        cap = pltpu.get_tpu_info().vmem_capacity_bytes
    except Exception:
        cap = 64 * 1024 * 1024
    return min(int(cap) * 3 // 4, 100 * 1024 * 1024)


def _linear_gridded(x, weight, bias, mxu_dtype):
    B, K = x.shape
    N = weight.shape[0]
    b2 = bias.reshape(1, N)
    if mxu_dtype is not None:
        # Low-precision MXU operands (f32 accumulation stays exact enough for
        # most linear layers): ~4x MXU throughput on v6e/v7x, half HBM traffic.
        x = x.astype(mxu_dtype)
        weight = weight.astype(mxu_dtype)

    # Larger tk amortizes the per-k accumulator read-modify-write; tm prefers
    # >= 2 blocks so the leading "parallel" axis splits across v7x cores.
    tm = _choose_tile(B, (512, 256, 128), want_multiple_blocks=True)
    tn = _choose_tile(N, (512, 256, 128))
    tk = _choose_tile(K, (2048, 1024, 512, 256, 128))
    grid = (pl.cdiv(B, tm), pl.cdiv(N, tn), pl.cdiv(K, tk))

    return pl.pallas_call(
        _matmul_bias_kernel,
        out_shape=jax.ShapeDtypeStruct((B, N), jnp.float32),
        grid_spec=pltpu.PrefetchScalarGridSpec(
            num_scalar_prefetch=0,
            grid=grid,
            in_specs=[
                pl.BlockSpec((tm, tk), lambda i, j, k: (i, k)),
                pl.BlockSpec((tn, tk), lambda i, j, k: (j, k)),   # weight (N, K)
                pl.BlockSpec((1, tn), lambda i, j, k: (0, j)),
            ],
            out_specs=pl.BlockSpec((tm, tn), lambda i, j, k: (i, j)),
        ),
        compiler_params=pltpu.CompilerParams(
            dimension_semantics=("parallel", "parallel", "arbitrary"),
            vmem_limit_bytes=_vmem_limit_bytes(),
        ),
    )(x, weight, b2)


# ---------------------------------------------------------------------------
# Public forward: y = x @ weight.T + bias  (PyTorch nn.Linear convention)
# ---------------------------------------------------------------------------
@functools.partial(jax.jit, static_argnames=("mxu_dtype",))
def lr_forward(x, weight, bias, mxu_dtype=None):
    """x: (B, in_f) f32, weight: (out_f, in_f) f32, bias: (out_f,) f32.

    mxu_dtype: optional lower-precision MXU operand dtype (e.g. jnp.bfloat16)
    for the gridded path; accumulation is always f32.
    """
    K = x.shape[1]
    if K <= 8:
        # TODO(synk): for truly tiny B*N a plain XLA `x @ weight.T + bias` beats
        # any custom call; kept as a Pallas kernel per the exercise spec.
        return _linear_small_k(x, weight, bias)
    return _linear_gridded(x, weight, bias, mxu_dtype)


def init_lr_params(key, in_size, output_size):
    """Deterministic init mimicking nn.Linear: U(-1/sqrt(in), 1/sqrt(in))."""
    kw, kb = jax.random.split(key)
    bound = 1.0 / (in_size ** 0.5)
    weight = jax.random.uniform(
        kw, (output_size, in_size), jnp.float32, minval=-bound, maxval=bound
    )
    bias = jax.random.uniform(
        kb, (output_size,), jnp.float32, minval=-bound, maxval=bound
    )
    return weight, bias


if __name__ == "__main__":
    key = jax.random.PRNGKey(0)
    k_param, k_x, k_big = jax.random.split(key, 3)

    # --- LR case from the original script: in_size = out_size = 1 ------------
    in_size, output_size = 1, 1
    weight, bias = init_lr_params(k_param, in_size, output_size)

    x = jnp.array([[1.0], [243.0], [22.0]], dtype=jnp.float32)
    x_rand = jax.random.normal(k_x, (8, in_size), dtype=jnp.float32)

    out = jax.block_until_ready(lr_forward(x, weight, bias))
    out_rand = jax.block_until_ready(lr_forward(x_rand, weight, bias))

    ref = x @ weight.T + bias
    ref_rand = x_rand @ weight.T + bias
    assert out.shape == (3, output_size)
    assert out_rand.shape == (8, output_size)
    assert jnp.allclose(out, ref, atol=1e-5, rtol=1e-5)
    assert jnp.allclose(out_rand, ref_rand, atol=1e-5, rtol=1e-5)

    # --- Exercise the gridded MXU template path ------------------------------
    kb_w, kb_b, kb_x = jax.random.split(k_big, 3)
    Bb, Kb, Nb = 256, 384, 256            # tm=128 (2 M-blocks), tn=256, tk=128
    w_big = jax.random.uniform(kb_w, (Nb, Kb), jnp.float32, minval=-0.05, maxval=0.05)
    b_big = jax.random.uniform(kb_b, (Nb,), jnp.float32, minval=-0.05, maxval=0.05)
    x_big = jax.random.normal(kb_x, (Bb, Kb), dtype=jnp.float32)

    ref_big = x_big @ w_big.T + b_big

    out_f32 = jax.block_until_ready(lr_forward(x_big, w_big, b_big))
    assert out_f32.shape == (Bb, Nb)
    assert jnp.allclose(out_f32, ref_big, atol=2e-2, rtol=2e-2)

    out_bf16 = jax.block_until_ready(
        lr_forward(x_big, w_big, b_big, mxu_dtype=jnp.bfloat16)
    )
    assert out_bf16.shape == (Bb, Nb)
    assert jnp.allclose(out_bf16, ref_big, atol=2e-2, rtol=2e-2)

    print("KERNEL_OK")
</pallas_src>

<mosaic_0001>
module attributes {stable_mosaic.version = 11 : i64} {
  func.func @_linear_small_k_kernel(%arg0: i32, %arg1: memref<3x1xf32, #tpu.memory_space<vmem>>, %arg2: memref<1x1xf32, #tpu.memory_space<vmem>>, %arg3: memref<1x1xf32, #tpu.memory_space<vmem>>, %arg4: memref<3x1xf32, #tpu.memory_space<vmem>>) attributes {dimension_semantics = [#tpu.dimension_semantics<parallel>], iteration_bounds = array<i64: 1>, scalar_prefetch = 0 : i64, scratch_operands = 0 : i64, tpu.core_type = #tpu.core_type<tc>, window_params = [{transform_indices = @transform_0, window_bounds = array<i64: 3, 1>}, {pipeline_mode = #tpu.pipeline_mode<synchronous>, transform_indices = @transform_1, window_bounds = array<i64: 1, 1>}, {pipeline_mode = #tpu.pipeline_mode<synchronous>, transform_indices = @transform_2, window_bounds = array<i64: 1, 1>}, {transform_indices = @transform_3, window_bounds = array<i64: 3, 1>}]} {
    %c0 = arith.constant 0 : index
    %c0_0 = arith.constant 0 : index
    %0 = vector.load %arg1[%c0, %c0_0] : memref<3x1xf32, #tpu.memory_space<vmem>>, vector<3x1xf32>
    %c0_1 = arith.constant 0 : index
    %c0_2 = arith.constant 0 : index
    %1 = vector.load %arg2[%c0_1, %c0_2] : memref<1x1xf32, #tpu.memory_space<vmem>>, vector<1x1xf32>
    %cst = arith.constant 0.000000e+00 : f32
    %2 = vector.broadcast %cst : f32 to vector<3x1xf32>
    %c0_3 = arith.constant 0 : index
    %c0_4 = arith.constant 0 : index
    %3 = vector.load %arg3[%c0_3, %c0_4] : memref<1x1xf32, #tpu.memory_space<vmem>>, vector<1x1xf32>
    %4 = vector.broadcast %3 : vector<1x1xf32> to vector<3x1xf32>
    %5 = arith.addf %2, %4 : vector<3x1xf32>
    %6 = vector.broadcast %1 : vector<1x1xf32> to vector<3x1xf32>
    %7 = arith.mulf %0, %6 : vector<3x1xf32>
    %8 = arith.addf %5, %7 : vector<3x1xf32>
    %c0_5 = arith.constant 0 : index
    %c0_6 = arith.constant 0 : index
    %9 = vector.load %arg4[%c0_5, %c0_6] : memref<3x1xf32, #tpu.memory_space<vmem>>, vector<3x1xf32>
    tpu.vector_store %arg4[%c0_5, %c0_6], %8 {strides = array<i32>} : memref<3x1xf32, #tpu.memory_space<vmem>>, vector<3x1xf32>,
    return
  }
  func.func @transform_0(%arg0: i32) -> (i32, i32) {
    %c0_i32 = arith.constant 0 : i32
    %c0_i32_0 = arith.constant 0 : i32
    return %arg0, %c0_i32 : i32, i32
  }
  func.func @transform_1(%arg0: i32) -> (i32, i32) {
    %c0_i32 = arith.constant 0 : i32
    %c0_i32_0 = arith.constant 0 : i32
    %c0_i32_1 = arith.constant 0 : i32
    return %c0_i32, %c0_i32_0 : i32, i32
  }
  func.func @transform_2(%arg0: i32) -> (i32, i32) {
    %c0_i32 = arith.constant 0 : i32
    %c0_i32_0 = arith.constant 0 : i32
    %c0_i32_1 = arith.constant 0 : i32
    return %c0_i32, %c0_i32_0 : i32, i32
  }
  func.func @transform_3(%arg0: i32) -> (i32, i32) {
    %c0_i32 = arith.constant 0 : i32
    %c0_i32_0 = arith.constant 0 : i32
    return %arg0, %c0_i32 : i32, i32
  }
}

</mosaic_0001>

<llo_original>
// kernel: lr_forward.1
$region0: #{lr_forward.1}
  #allocation0 [shape = 'u32[]', space=smem, size = 0x4, offset = 0x4, fixed_abs, tag = 'smem constant byte address 0x4 - core index']
  #allocation1 [shape = 'u32[72,128]{1,0:T(1,128)}', space=vmem, size = 0x9000, scoped, tag = 'internal scratch']
  #allocation2 [shape = 'f32[1,1]{1,0:T(1,128)S(1)}', space=vmem, size = 0x200, scoped, tag = 'scoped memory for lr_forward.1']
  #allocation3 [shape = 'f32[1,1]{1,0:T(1,128)S(1)}', space=vmem, size = 0x200, scoped, tag = 'scoped memory for lr_forward.1']
  %s0 = inlined_call_operand.vmem [shape: f32[3,1], index: 0, kind: input, shape index: {}]
  %s1 = inlined_call_operand.<no memory space> [shape: f32[1,1], index: 1, kind: input, shape index: {}]
  %s2 = inlined_call_operand.<no memory space> [shape: f32[1,1], index: 2, kind: input, shape index: {}]
  %s3 = inlined_call_operand.vmem [shape: f32[3,1], index: 3, kind: output, shape index: {}]
  %s4 = sld [smem:[#allocation0]]
  $region22: #{lr_forward.1} parent=0
    _
  %s6 = ssub.s32 1, %s4
  %s7 = scalar_select 0, %s6, %s4
  %v8 = vstv %s1
  %9 = vst [vmem:[#allocation2] sm:$0x1] %v8
  %v10 = vstv %s2
  %11 = vst [vmem:[#allocation3] sm:$0x1] %v10
  // Predicated region
  $region2: #{lr_forward.1} parent=0 // pred_check
    _
  $region3: #{lr_forward.1} parent=0 // pred_check_branch
    %13 = sbr.rel (0) target = $region5
  $region4: #{lr_forward.1} parent=0 // pred_region
    _
  $region5: #{lr_forward.1} parent=0 // pred_fallthru
    _
  // Predicated region
  $region6: #{lr_forward.1} parent=0 // pred_check
    _
  $region7: #{lr_forward.1} parent=0 // pred_check_branch
    %15 = sbr.rel (0) target = $region9
  $region8: #{lr_forward.1} parent=0 // pred_region
    _
  $region9: #{lr_forward.1} parent=0 // pred_fallthru
    _
  // Predicated region
  $region10: #{lr_forward.1} parent=0 // pred_check
    _
  $region11: #{lr_forward.1} parent=0 // pred_check_branch
    %17 = sbr.rel (0) target = $region13
  $region12: #{lr_forward.1} parent=0 // pred_region
    _
  $region13: #{lr_forward.1} parent=0 // pred_fallthru
    _
  %v18 = vld [vmem:[%s0] sm:$0x7]
  %v19 = vld [vmem:[#allocation2] sm:$0x1]
  %v20 = vld [vmem:[#allocation3] sm:$0x1]
  %v22 = vperm.slane %v20, 0
  %v24 = vadd.f32 %v22, 0.0
  %v26 = vperm.slane %v19, 0
  %v28 = vmul.f32 %v18, %v26
  %v29 = vadd.f32 %v24, %v28
  %vm30 = vcmask 2048
  %31 = vst.msk [vmem:[%s3] sm:$0x7] %vm30, %v29
  // Predicated region
  $region14: #{lr_forward.1} parent=0 // pred_check
    _
  $region15: #{lr_forward.1} parent=0 // pred_check_branch
    %33 = sbr.rel (0) target = $region17
  $region16: #{lr_forward.1} parent=0 // pred_region
    _
  $region17: #{lr_forward.1} parent=0 // pred_fallthru
    _
  // Predicated region
  $region18: #{lr_forward.1} parent=0 // pred_check
    _
  $region19: #{lr_forward.1} parent=0 // pred_check_branch
    %35 = sbr.rel (0) target = $region21
  $region20: #{lr_forward.1} parent=0 // pred_region
    _
  $region21: #{lr_forward.1} parent=0 // pred_fallthru
    _

</llo_original>
